<compile_context>
chip_gen: v5e
topology: v5e:2x2
jax: 0.10.0
libtpu: 0.0.40
codegen_flags: <defaults>
</compile_context>

<pallas_src>
import jax
import jax.numpy as jnp
import numpy as np
from jax.experimental import pallas as pl
from jax.experimental.pallas import tpu as pltpu


# ----------------------------- tunables -------------------------------------
_GRID_MIN_BATCH = 1024     # below this a batch grid is pure per-step overhead
_ROW_TILE = 512            # rows per grid step (>=512 amortizes ~0.35us/step)
_SPLIT_HEADS_MIN_H = 128   # below 128 lanes/head the block-diag W2 is free


def _round_up(n, m):
    return ((n + m - 1) // m) * m


# ----------------------------------------------------------------------------
# Kernel: fused two-head critic on one row-tile.
#   x_ref     [TB, in_pad]           f32 or bf16 (matmul input dtype)
#   wslab_ref [in_pad + 3, 2H]       rows 0:in_pad = W1, then b1, b2, b3 rows
#   w2_ref    [2H, 2H] block-diag  OR  [2, H, H] stacked per-head
#   w3_ref    [2H, 2]
#   q_ref     [TB, 2]                f32 (col 0 = Q1, col 1 = Q2)
# ----------------------------------------------------------------------------
def critic_kernel(x_ref, wslab_ref, w2_ref, w3_ref, q_ref):
    in_pad = x_ref.shape[1]
    cdt = x_ref.dtype          # MXU input dtype; accumulation is always f32

    w1 = wslab_ref[0:in_pad, :]
    b1 = wslab_ref[in_pad:in_pad + 1, :].astype(jnp.float32)
    b2 = wslab_ref[in_pad + 1:in_pad + 2, :].astype(jnp.float32)
    b3 = wslab_ref[in_pad + 2:in_pad + 3, 0:2].astype(jnp.float32)

    # Layer 1: single fused dot over the (padded) obs||action features.
    h = jnp.dot(x_ref[...], w1, preferred_element_type=jnp.float32) + b1
    h = jnp.maximum(h, 0.0).astype(cdt)            # ReLU in f32, repack for MXU

    # Layer 2: block-diagonal for small H, two per-head dots for H >= 128.
    if len(w2_ref.shape) == 3:
        H = w2_ref.shape[1]
        h2 = jnp.concatenate(
            [jnp.dot(h[:, :H], w2_ref[0], preferred_element_type=jnp.float32),
             jnp.dot(h[:, H:], w2_ref[1], preferred_element_type=jnp.float32)],
            axis=1) + b2
    else:
        h2 = jnp.dot(h, w2_ref[...], preferred_element_type=jnp.float32) + b2
    h2 = jnp.maximum(h2, 0.0).astype(cdt)

    # Layer 3: [TB, 2] output. Output volume is tiny, keep it lane-sparse.
    q_ref[...] = jnp.dot(h2, w3_ref[...], preferred_element_type=jnp.float32) + b3


# ----------------------------------------------------------------------------
# One-time host-side packing of PyTorch-layout params ([out, in] weights).
# ----------------------------------------------------------------------------
def pack_critic_params(params_q1, params_q2, *, compute_dtype=jnp.float32):
    (w1a, b1a), (w2a, b2a), (w3a, b3a) = params_q1
    (w1b, b1b), (w2b, b2b), (w3b, b3b) = params_q2
    H = w1a.shape[0]
    in_dim = w1a.shape[1]
    in_pad = _round_up(in_dim, 8)

    # Weight slab: W1 (feature rows zero-padded to a sublane multiple) + bias rows.
    slab = jnp.zeros((in_pad + 3, 2 * H), jnp.float32)
    slab = slab.at[:in_dim, :H].set(w1a.T).at[:in_dim, H:].set(w1b.T)
    slab = slab.at[in_pad, :H].set(b1a).at[in_pad, H:].set(b1b)
    slab = slab.at[in_pad + 1, :H].set(b2a).at[in_pad + 1, H:].set(b2b)
    slab = slab.at[in_pad + 2, 0].set(b3a[0]).at[in_pad + 2, 1].set(b3b[0])

    if H >= _SPLIT_HEADS_MIN_H:
        # Stacked per-head [H,H] weights: avoid 2x FLOPs/bytes of block-diag zeros.
        w2 = jnp.stack([w2a.T, w2b.T])                       # [2, H, H]
    else:
        w2 = jnp.zeros((2 * H, 2 * H), jnp.float32)
        w2 = w2.at[:H, :H].set(w2a.T).at[H:, H:].set(w2b.T)  # block-diag [2H, 2H]

    w3 = jnp.zeros((2 * H, 2), jnp.float32)
    w3 = w3.at[:H, 0].set(w3a[0]).at[H:, 1].set(w3b[0])

    cdt = jnp.dtype(compute_dtype)
    return (slab.astype(cdt), w2.astype(cdt), w3.astype(cdt))


# ----------------------------------------------------------------------------
# Jitted forward: obs [B, obs_dim], action [B, act_dim] -> (q1 [B,1], q2 [B,1]).
# ----------------------------------------------------------------------------
@jax.jit
def critic_forward(obs, action, packed_params):
    w_slab, w2, w3 = packed_params
    cdt = w_slab.dtype                 # compute dtype decided at pack time
    B = obs.shape[0]
    in_dim = obs.shape[1] + action.shape[1]
    in_pad = w_slab.shape[0] - 3
    H2 = w3.shape[0]                   # 2 * hidden_dim

    # XLA fuses the concat/pad/cast into the input stream for free.
    x = jnp.concatenate([obs, action], axis=1).astype(cdt)
    if in_pad > in_dim:
        x = jnp.pad(x, ((0, 0), (0, in_pad - in_dim)))

    if w2.ndim == 3:
        layer2_flops_per_row = 2 * 2 * w2.shape[1] * w2.shape[2]   # two HxH dots
    else:
        layer2_flops_per_row = 2 * H2 * H2
    flops = B * (2 * in_pad * H2 + layer2_flops_per_row + 2 * H2 * 2)
    bytes_accessed = (x.size * x.dtype.itemsize
                      + w_slab.size * w_slab.dtype.itemsize
                      + w2.size * w2.dtype.itemsize
                      + w3.size * w3.dtype.itemsize
                      + B * 2 * 4)
    ce = pl.CostEstimate(flops=flops, transcendentals=0,
                         bytes_accessed=bytes_accessed)

    if B < _GRID_MIN_BATCH:
        # Small batch: gridless, whole problem resident in VMEM (a grid would be
        # pure dispatch overhead at this size).
        vmem = pl.BlockSpec(memory_space=pltpu.MemorySpace.VMEM)
        q = pl.pallas_call(
            critic_kernel,
            out_shape=jax.ShapeDtypeStruct((B, 2), jnp.float32),
            in_specs=[vmem] * 4,
            out_specs=vmem,
            cost_estimate=ce,
        )(x, w_slab, w2, w3)
    else:
        # Realistic batch: row-tiled pipeline over the batch; weights stay
        # VMEM-resident (constant index_map); "parallel" shards across v7x's 2 TCs.
        tb = _ROW_TILE
        num_tiles = pl.cdiv(B, tb)
        b_pad = num_tiles * tb
        if b_pad > B:
            x = jnp.pad(x, ((0, b_pad - B), (0, 0)))
        w2_spec = pl.BlockSpec(w2.shape, lambda i: (0,) * w2.ndim)
        q = pl.pallas_call(
            critic_kernel,
            out_shape=jax.ShapeDtypeStruct((b_pad, 2), jnp.float32),
            grid=(num_tiles,),
            in_specs=[pl.BlockSpec((tb, in_pad), lambda i: (i, 0)),
                      pl.BlockSpec(w_slab.shape, lambda i: (0, 0)),
                      w2_spec,
                      pl.BlockSpec(w3.shape, lambda i: (0, 0))],
            out_specs=pl.BlockSpec((tb, 2), lambda i: (i, 0)),
            compiler_params=pltpu.CompilerParams(
                dimension_semantics=("parallel",),
                vmem_limit_bytes=32 * 1024 * 1024),
            cost_estimate=ce,
        )(x, w_slab, w2, w3)
        q = q[:B]

    return q[:, 0:1], q[:, 1:2]


# ----------------------------------------------------------------------------
# Parameter init (orthogonal weights like nn.init.orthogonal_, zero biases by
# default to match weight_init; bias_scale>0 only to exercise the bias path).
# ----------------------------------------------------------------------------
def orthogonal(key, out_dim, in_dim, dtype=jnp.float32):
    rows, cols = out_dim, in_dim
    flat = jax.random.normal(key, (max(rows, cols), min(rows, cols)), jnp.float32)
    q, r = jnp.linalg.qr(flat)
    d = jnp.diagonal(r)
    q = q * jnp.where(d >= 0, 1.0, -1.0)      # sign fix; never zeroes a column
    if rows < cols:
        q = q.T
    return q[:rows, :cols].astype(dtype)


def make_qfunction_params(key, obs_dim, action_dim, hidden_dim, bias_scale=0.0):
    k1, k2, k3, kb = jax.random.split(key, 4)
    b1k, b2k, b3k = jax.random.split(kb, 3)
    in_dim = obs_dim + action_dim

    def bias(k, n):
        if bias_scale == 0.0:
            return jnp.zeros((n,), jnp.float32)
        return bias_scale * jax.random.normal(k, (n,), jnp.float32)

    return (
        (orthogonal(k1, hidden_dim, in_dim), bias(b1k, hidden_dim)),
        (orthogonal(k2, hidden_dim, hidden_dim), bias(b2k, hidden_dim)),
        (orthogonal(k3, 1, hidden_dim), bias(b3k, 1)),
    )


# Pure-JAX reference (unfused, PyTorch layout / x @ W.T + b semantics).
def critic_reference(obs, action, params_q1, params_q2):
    x = jnp.concatenate([obs, action], axis=1).astype(jnp.float32)

    def qfn(p):
        (w1, b1), (w2, b2), (w3, b3) = p
        h = jnp.maximum(x @ w1.T + b1, 0.0)
        h = jnp.maximum(h @ w2.T + b2, 0.0)
        return h @ w3.T + b3

    return qfn(params_q1), qfn(params_q2)


def _as_bf16_f32(tree):
    """Round every leaf to bf16 and back to f32 (matches kernel input rounding)."""
    return jax.tree_util.tree_map(
        lambda a: a.astype(jnp.bfloat16).astype(jnp.float32), tree)


if __name__ == "__main__":
    key = jax.random.PRNGKey(0)

    # --- Test 1: shipped small sizes, f32, gridless VMEM path ----------------
    batch, obs_dim, action_dim, hidden_dim = 8, 12, 4, 32
    k_obs, k_act, k_q1, k_q2 = jax.random.split(key, 4)
    obs = jax.random.normal(k_obs, (batch, obs_dim), jnp.float32)
    action = jax.random.normal(k_act, (batch, action_dim), jnp.float32)
    # bias_scale > 0 only to make the correctness check exercise the bias path
    # (weight_init itself zeroes biases).
    params_q1 = make_qfunction_params(k_q1, obs_dim, action_dim, hidden_dim, 0.1)
    params_q2 = make_qfunction_params(k_q2, obs_dim, action_dim, hidden_dim, 0.1)

    packed = pack_critic_params(params_q1, params_q2, compute_dtype=jnp.float32)
    q1, q2 = critic_forward(obs, action, packed)
    jax.block_until_ready((q1, q2))
    r1, r2 = critic_reference(obs, action, params_q1, params_q2)
    np.testing.assert_allclose(np.asarray(q1), np.asarray(r1), rtol=1e-5, atol=1e-5)
    np.testing.assert_allclose(np.asarray(q2), np.asarray(r2), rtol=1e-5, atol=1e-5)

    # --- Test 2: realistic batch -> row-tiled "parallel" grid, split-head W2,
    #             f32 (tight check of grid tiling / padding / per-head layer 2) --
    batch2, hidden2 = 2000, 128
    k_obs2, k_act2, k_q1b, k_q2b = jax.random.split(jax.random.PRNGKey(1), 4)
    obs2 = jax.random.normal(k_obs2, (batch2, obs_dim), jnp.float32)
    act2 = jax.random.normal(k_act2, (batch2, action_dim), jnp.float32)
    p1b = make_qfunction_params(k_q1b, obs_dim, action_dim, hidden2, 0.1)
    p2b = make_qfunction_params(k_q2b, obs_dim, action_dim, hidden2, 0.1)

    packed_f32 = pack_critic_params(p1b, p2b, compute_dtype=jnp.float32)
    q1b, q2b = critic_forward(obs2, act2, packed_f32)
    jax.block_until_ready((q1b, q2b))
    r1b, r2b = critic_reference(obs2, act2, p1b, p2b)
    np.testing.assert_allclose(np.asarray(q1b), np.asarray(r1b), rtol=1e-4, atol=1e-4)
    np.testing.assert_allclose(np.asarray(q2b), np.asarray(r2b), rtol=1e-4, atol=1e-4)

    # --- Test 3: same config with bf16 MXU inputs (f32 accumulation). Compared
    #             against an f32 reference on bf16-rounded inputs/params; the
    #             remaining gap is intermediate-activation rounding only. -------
    packed_bf16 = pack_critic_params(p1b, p2b, compute_dtype=jnp.bfloat16)
    q1c, q2c = critic_forward(obs2, act2, packed_bf16)
    jax.block_until_ready((q1c, q2c))
    r1c, r2c = critic_reference(_as_bf16_f32(obs2), _as_bf16_f32(act2),
                                _as_bf16_f32(p1b), _as_bf16_f32(p2b))
    np.testing.assert_allclose(np.asarray(q1c), np.asarray(r1c), rtol=5e-2, atol=5e-2)
    np.testing.assert_allclose(np.asarray(q2c), np.asarray(r2c), rtol=5e-2, atol=5e-2)

    print("KERNEL_OK")
</pallas_src>

<mosaic_0001>
module attributes {stable_mosaic.version = 11 : i64} {
  func.func @critic_kernel(%arg0: memref<8x16xf32, #tpu.memory_space<vmem>>, %arg1: memref<19x64xf32, #tpu.memory_space<vmem>>, %arg2: memref<64x64xf32, #tpu.memory_space<vmem>>, %arg3: memref<64x2xf32, #tpu.memory_space<vmem>>, %arg4: memref<8x2xf32, #tpu.memory_space<vmem>>) attributes {dimension_semantics = [], scalar_prefetch = 0 : i64, scratch_operands = 0 : i64, tpu.core_type = #tpu.core_type<tc>} {
    %c0 = arith.constant 0 : index
    %c0_0 = arith.constant 0 : index
    %0 = vector.load %arg1[%c0, %c0_0] : memref<19x64xf32, #tpu.memory_space<vmem>>, vector<16x64xf32>
    %c16 = arith.constant 16 : index
    %c0_1 = arith.constant 0 : index
    %1 = vector.load %arg1[%c16, %c0_1] : memref<19x64xf32, #tpu.memory_space<vmem>>, vector<1x64xf32>
    %c17 = arith.constant 17 : index
    %c0_2 = arith.constant 0 : index
    %2 = vector.load %arg1[%c17, %c0_2] : memref<19x64xf32, #tpu.memory_space<vmem>>, vector<1x64xf32>
    %c18 = arith.constant 18 : index
    %c0_3 = arith.constant 0 : index
    %3 = vector.load %arg1[%c18, %c0_3] : memref<19x64xf32, #tpu.memory_space<vmem>>, vector<1x2xf32>
    %c0_4 = arith.constant 0 : index
    %c0_5 = arith.constant 0 : index
    %4 = vector.load %arg0[%c0_4, %c0_5] : memref<8x16xf32, #tpu.memory_space<vmem>>, vector<8x16xf32>
    %cst = arith.constant dense<0.000000e+00> : vector<8x64xf32>
    %5 = tpu.matmul %4, %0, %cst {dimension_numbers = #tpu.dot_dimension_numbers<[1], [0], [0], [1], [0, 0, 1, 1], [], []>} : vector<8x16xf32>, vector<16x64xf32>, vector<8x64xf32> -> vector<8x64xf32>
    %6 = vector.broadcast %1 : vector<1x64xf32> to vector<8x64xf32>
    %7 = arith.addf %5, %6 : vector<8x64xf32>
    %cst_6 = arith.constant 0.000000e+00 : f32
    %8 = vector.broadcast %cst_6 : f32 to vector<8x64xf32>
    %9 = arith.maximumf %7, %8 : vector<8x64xf32>
    %c0_7 = arith.constant 0 : index
    %c0_8 = arith.constant 0 : index
    %10 = vector.load %arg2[%c0_7, %c0_8] : memref<64x64xf32, #tpu.memory_space<vmem>>, vector<64x64xf32>
    %cst_9 = arith.constant dense<0.000000e+00> : vector<8x64xf32>
    %11 = tpu.matmul %9, %10, %cst_9 {dimension_numbers = #tpu.dot_dimension_numbers<[1], [0], [0], [1], [0, 0, 1, 1], [], []>} : vector<8x64xf32>, vector<64x64xf32>, vector<8x64xf32> -> vector<8x64xf32>
    %12 = vector.broadcast %2 : vector<1x64xf32> to vector<8x64xf32>
    %13 = arith.addf %11, %12 : vector<8x64xf32>
    %cst_10 = arith.constant 0.000000e+00 : f32
    %14 = vector.broadcast %cst_10 : f32 to vector<8x64xf32>
    %15 = arith.maximumf %13, %14 : vector<8x64xf32>
    %c0_11 = arith.constant 0 : index
    %c0_12 = arith.constant 0 : index
    %16 = vector.load %arg3[%c0_11, %c0_12] : memref<64x2xf32, #tpu.memory_space<vmem>>, vector<64x2xf32>
    %cst_13 = arith.constant dense<0.000000e+00> : vector<8x2xf32>
    %17 = tpu.matmul %15, %16, %cst_13 {dimension_numbers = #tpu.dot_dimension_numbers<[1], [0], [0], [1], [0, 0, 1, 1], [], []>} : vector<8x64xf32>, vector<64x2xf32>, vector<8x2xf32> -> vector<8x2xf32>
    %18 = vector.broadcast %3 : vector<1x2xf32> to vector<8x2xf32>
    %19 = arith.addf %17, %18 : vector<8x2xf32>
    %c0_14 = arith.constant 0 : index
    %c0_15 = arith.constant 0 : index
    %20 = vector.load %arg4[%c0_14, %c0_15] : memref<8x2xf32, #tpu.memory_space<vmem>>, vector<8x2xf32>
    tpu.vector_store %arg4[%c0_14, %c0_15], %19 {strides = array<i32>} : memref<8x2xf32, #tpu.memory_space<vmem>>, vector<8x2xf32>,
    return
  }
}

</mosaic_0001>

<llo_original>
// kernel: critic_forward.1
$region0: #{critic_forward.1}
  #allocation0 [shape = 'u32[]', space=smem, size = 0x4, offset = 0x4, fixed_abs, tag = 'smem constant byte address 0x4 - core index']
  #allocation1 [shape = 'u32[72,128]{1,0:T(1,128)}', space=vmem, size = 0x9000, scoped, tag = 'internal scratch']
  %s0 = inlined_call_operand.vmem [shape: f32[8,16], index: 0, kind: input, shape index: {}]
  %s1 = inlined_call_operand.vmem [shape: f32[19,64], index: 1, kind: input, shape index: {}]
  %s2 = inlined_call_operand.vmem [shape: f32[64,64], index: 2, kind: input, shape index: {}]
  %s3 = inlined_call_operand.vmem [shape: f32[64,2], index: 3, kind: input, shape index: {}]
  %s4 = inlined_call_operand.vmem [shape: f32[8,2], index: 4, kind: output, shape index: {}]
  %s5 = sld [smem:[#allocation0]]
  $region26: #{critic_forward.1} parent=0
    _
  %s7 = ssub.s32 1, %s5
  %s8 = scalar_select 0, %s7, %s5
  // Predicated region
  $region2: #{critic_forward.1} parent=0 // pred_check
    _
  $region3: #{critic_forward.1} parent=0 // pred_check_branch
    %10 = sbr.rel (0) target = $region5
  $region4: #{critic_forward.1} parent=0 // pred_region
    _
  $region5: #{critic_forward.1} parent=0 // pred_fallthru
    _
  // Predicated region
  $region6: #{critic_forward.1} parent=0 // pred_check
    _
  $region7: #{critic_forward.1} parent=0 // pred_check_branch
    %12 = sbr.rel (0) target = $region9
  $region8: #{critic_forward.1} parent=0 // pred_region
    _
  $region9: #{critic_forward.1} parent=0 // pred_fallthru
    _
  // Predicated region
  $region10: #{critic_forward.1} parent=0 // pred_check
    _
  $region11: #{critic_forward.1} parent=0 // pred_check_branch
    %14 = sbr.rel (0) target = $region13
  $region12: #{critic_forward.1} parent=0 // pred_region
    _
  $region13: #{critic_forward.1} parent=0 // pred_fallthru
    _
  // Predicated region
  $region14: #{critic_forward.1} parent=0 // pred_check
    _
  $region15: #{critic_forward.1} parent=0 // pred_check_branch
    %16 = sbr.rel (0) target = $region17
  $region16: #{critic_forward.1} parent=0 // pred_region
    _
  $region17: #{critic_forward.1} parent=0 // pred_fallthru
    _
  %v17 = vld [vmem:[%s1] sm:$0xff]
  %v18 = vld [vmem:[%s1 + $0x8] sm:$0xff]
  %v19 = vld [vmem:[%s1 + $0x10] sm:$0x1]
  %v20 = vld [vmem:[%s1 + $0x11] sm:$0x1]
  %v21 = vld [vmem:[%s1 + $0x12] sm:$0x1]
  %v22 = vld [vmem:[%s0] sm:$0xff]
  %v23 = vperm.slane %v19, 0
  %vm24 = vcmask 130048
  %v26 = vsel %vm24, %v22, 0
  %28 = vmatpush.msra.mxu0 0.0
  %29 = vmatpush.msra.mxu0 0.0
  %30 = vmatpush.msra.mxu0 0.0
  %31 = vmatpush.msra.mxu0 0.0
  %32 = vmatpush.msra.mxu0 0.0
  %33 = vmatpush.msra.mxu0 0.0
  %34 = vmatpush.msra.mxu0 0.0
  %35 = vmatpush.msra.mxu0 0.0
  %36 = vmatpush.msra.mxu0 0.0
  %37 = vmatpush.msra.mxu0 0.0
  %38 = vmatpush.msra.mxu0 0.0
  %39 = vmatpush.msra.mxu0 0.0
  %40 = vmatpush.msra.mxu0 0.0
  %41 = vmatpush.msra.mxu0 0.0
  %42 = vmatpush.msra.mxu0 %v18
  %43 = vmatpush.msra.mxu0 %v17
  %44 = vmatmul.f32.gmra.mxu0 %v26
  %v45 = vpop.f32.mrf.mxu0
  %v46 = vadd.f32 %v23, %v45
  %47 = vdwg.mxu0
  %v48 = vmax.f32 %v46, 0.0
  %v49 = vld [vmem:[%s2] sm:$0xff]
  %v50 = vld [vmem:[%s2 + $0x8] sm:$0xff]
  %v51 = vld [vmem:[%s2 + $0x10] sm:$0xff]
  %v52 = vld [vmem:[%s2 + $0x18] sm:$0xff]
  %v53 = vld [vmem:[%s2 + $0x20] sm:$0xff]
  %v54 = vld [vmem:[%s2 + $0x28] sm:$0xff]
  %v55 = vld [vmem:[%s2 + $0x30] sm:$0xff]
  %v56 = vld [vmem:[%s2 + $0x38] sm:$0xff]
  %v57 = vperm.slane %v20, 0
  %vm58 = vcmask 523264
  %v60 = vsel %vm58, %v48, 0
  %62 = vmatpush.msra.mxu0 0.0
  %63 = vmatpush.msra.mxu0 0.0
  %64 = vmatpush.msra.mxu0 0.0
  %65 = vmatpush.msra.mxu0 0.0
  %66 = vmatpush.msra.mxu0 0.0
  %67 = vmatpush.msra.mxu0 0.0
  %68 = vmatpush.msra.mxu0 0.0
  %69 = vmatpush.msra.mxu0 0.0
  %70 = vmatpush.msra.mxu0 %v56
  %71 = vmatpush.msra.mxu0 %v55
  %72 = vmatpush.msra.mxu0 %v54
  %73 = vmatpush.msra.mxu0 %v53
  %74 = vmatpush.msra.mxu0 %v52
  %75 = vmatpush.msra.mxu0 %v51
  %76 = vmatpush.msra.mxu0 %v50
  %77 = vmatpush.msra.mxu0 %v49
  %78 = vmatmul.f32.gmra.mxu0 %v60
  %v79 = vpop.f32.mrf.mxu0
  %v80 = vadd.f32 %v57, %v79
  %81 = vdwg.mxu0
  %v82 = vmax.f32 %v80, 0.0
  %v83 = vld [vmem:[%s3] sm:$0xff]
  %v84 = vld [vmem:[%s3 + $0x8] sm:$0xff]
  %v85 = vld [vmem:[%s3 + $0x10] sm:$0xff]
  %v86 = vld [vmem:[%s3 + $0x18] sm:$0xff]
  %v87 = vld [vmem:[%s3 + $0x20] sm:$0xff]
  %v88 = vld [vmem:[%s3 + $0x28] sm:$0xff]
  %v89 = vld [vmem:[%s3 + $0x30] sm:$0xff]
  %v90 = vld [vmem:[%s3 + $0x38] sm:$0xff]
  %v91 = vperm.slane %v21, 0
  %v93 = vsel %vm58, %v82, 0
  %95 = vmatpush.msra.mxu0 0.0
  %96 = vmatpush.msra.mxu0 0.0
  %97 = vmatpush.msra.mxu0 0.0
  %98 = vmatpush.msra.mxu0 0.0
  %99 = vmatpush.msra.mxu0 0.0
  %100 = vmatpush.msra.mxu0 0.0
  %101 = vmatpush.msra.mxu0 0.0
  %102 = vmatpush.msra.mxu0 0.0
  %103 = vmatpush.msra.mxu0 %v90
  %104 = vmatpush.msra.mxu0 %v89
  %105 = vmatpush.msra.mxu0 %v88
  %106 = vmatpush.msra.mxu0 %v87
  %107 = vmatpush.msra.mxu0 %v86
  %108 = vmatpush.msra.mxu0 %v85
  %109 = vmatpush.msra.mxu0 %v84
  %110 = vmatpush.msra.mxu0 %v83
  %111 = vmatmul.f32.gmra.mxu0 %v93
  %v112 = vpop.f32.mrf.mxu0
  %v113 = vadd.f32 %v91, %v112
  %114 = vdwg.mxu0
  %vm115 = vcmask 15360
  %116 = vst.msk [vmem:[%s4] sm:$0xff] %vm115, %v113
  // Predicated region
  $region18: #{critic_forward.1} parent=0 // pred_check
    _
  $region19: #{critic_forward.1} parent=0 // pred_check_branch
    %118 = sbr.rel (0) target = $region21
  $region20: #{critic_forward.1} parent=0 // pred_region
    _
  $region21: #{critic_forward.1} parent=0 // pred_fallthru
    _
  // Predicated region
  $region22: #{critic_forward.1} parent=0 // pred_check
    _
  $region23: #{critic_forward.1} parent=0 // pred_check_branch
    %120 = sbr.rel (0) target = $region25
  $region24: #{critic_forward.1} parent=0 // pred_region
    _
  $region25: #{critic_forward.1} parent=0 // pred_fallthru
    _

</llo_original>
